<compile_context>
chip_gen: v7x
topology: tpu7x:2x2x1
jax: 0.10.0
libtpu: 0.0.40
codegen_flags: <defaults>
</compile_context>

<pallas_src>
import functools

import jax
import jax.numpy as jnp
from jax.experimental import pallas as pl
from jax.experimental.pallas import tpu as pltpu

# ----- fixed architecture hyper-parameters (hard-coded in the torch __init__) --
F1 = 16
F2 = 32
D = 4
FD = F1 * D          # 64
C = 20               # num_electrodes
C_PAD = 32           # electrodes padded so each im2col row-block is a bf16 tile
T_IN = 800           # chunk_size
K1 = 64              # kernel_1
K2 = 16              # kernel_2
NUM_CLASSES = 2
EPS = 1e-3

PAD_L = K1 // 2      # 32  (block-1 temporal conv padding)
PAD2 = K2 // 2       # 8   (block-2 temporal conv padding)
T_W = 896            # lane-padded per-example block-1 width (>= 800 + 64)
T1 = T_IN + 2 * PAD_L - K1 + 1            # 801 valid conv-1 outputs
T_P1 = (T1 - 4) // 4 + 1                  # 200 after AvgPool(1,4)
TP1_W = 256          # lane-padded pooled width; data lives in cols [8, 208)
T2 = T_P1 + 2 * PAD2 - K2 + 1             # 201 valid conv-2 outputs
T_P2 = (T2 - 8) // 8 + 1                  # 25 after AvgPool(1,8)
FEAT = F2 * T_P2                          # 800 == feature_dim()
OUT_W = 128          # lane-padded per-step output row
CK1 = 16             # block-1 im2col taps per chunk

# ---- wrap-safety invariants (roll wraparound must land only in zero regions) --
assert C_PAD % 16 == 0 and C_PAD >= C
assert FD % 16 == 0
assert T_W % 128 == 0 and TP1_W % 128 == 0 and OUT_W % 128 == 0
assert T_W >= T_IN + 2 * PAD_L
assert 4 * T_P1 <= T_W - (K1 - 1)      # block-1 wrapped cols hit zero p4 rows only
assert 8 * T_P2 <= TP1_W - (K2 - 1)    # block-2 wrapped cols hit zero M cols only
assert PAD2 + T_P1 <= TP1_W
assert K1 % CK1 == 0


# ---------------------------------------------------------------------------
# pltpu.roll direction probe (one tiny kernel, run once at setup time).
# ---------------------------------------------------------------------------
_ROLL_LIKE_JNP = None


def _roll_like_jnp():
    global _ROLL_LIKE_JNP
    if _ROLL_LIKE_JNP is None:
        def probe(x_ref, o_ref):
            o_ref[...] = pltpu.roll(x_ref[...], 1, 1)

        x = jax.lax.broadcasted_iota(jnp.float32, (8, 128), 1)
        y = pl.pallas_call(
            probe, out_shape=jax.ShapeDtypeStruct((8, 128), jnp.float32))(x)
        # jnp.roll semantics: out[0, 1] == x[0, 0] == 0
        _ROLL_LIKE_JNP = bool(jax.device_get(y)[0, 1] == 0.0)
    return _ROLL_LIKE_JNP


def _elu(y):
    # overflow-safe ELU (exp only sees the non-positive branch); f32 on the VPU/EUP
    return jnp.where(y > 0, y, jnp.exp(jnp.minimum(y, 0.0)) - 1.0)


# ------------------------------- Pallas kernel --------------------------------
def eegnet_kernel(x_ref, wall_ref, ball_ref, p4_ref, w2c_ref, b2c_ref, m_ref,
                  out_ref, im1_ref, acc1_ref, y2_ref, im2_ref,
                  *, tb, ck1, roll_like_jnp):
    n_w = tb * T_W            # tb examples stacked along the time (lane) axis
    nchunk = K1 // ck1

    def shift_left(v, k, width):
        # out[..., t] = v[..., (t + k) % width]
        if k == 0:
            return v
        amt = (width - k) if roll_like_jnp else k
        return pltpu.roll(v, amt, 1)

    # ---- block 1: fused conv1 + BN1 + depthwise spatial conv + BN2 ----------
    # Chunked im2col (f32 XLU rolls, cast to bf16 at the store into the
    # double-buffered chunk slab) accumulated on the MXU into a VMEM f32 acc.
    for c in range(nchunk):
        s = c & 1
        for kk in range(ck1):
            k = c * ck1 + kk
            im1_ref[s, kk * C_PAD:(kk + 1) * C_PAD, :] = shift_left(
                x_ref[0], k, n_w).astype(jnp.bfloat16)
        part = jnp.dot(wall_ref[c], im1_ref[s],
                       preferred_element_type=jnp.float32)       # (FD, n_w) f32
        if c == 0:
            acc1_ref[...] = part
        else:
            acc1_ref[...] = acc1_ref[...] + part

    # bias + ELU in f32, bf16 copy for the MXU consumers (pool matmul LHS)
    y2_ref[...] = _elu(acc1_ref[...] + ball_ref[...]).astype(jnp.bfloat16)

    # ---- AvgPool(1,4) as matmul vs p4 + block-2 im2col, per example ---------
    for b in range(tb):
        p1b = jnp.dot(y2_ref[:, b * T_W:(b + 1) * T_W], p4_ref[...],
                      preferred_element_type=jnp.float32)        # (FD, TP1_W)
        for k in range(K2):
            im2_ref[k * FD:(k + 1) * FD, b * TP1_W:(b + 1) * TP1_W] = (
                shift_left(p1b, k, TP1_W).astype(jnp.bfloat16))

    # ---- block 2: fused depthwise + pointwise conv + BN3 on the MXU ---------
    y4 = jnp.dot(w2c_ref[...], im2_ref[...],
                 preferred_element_type=jnp.float32)             # (F2, tb*TP1_W)
    y4 = _elu(y4 + b2c_ref[...])

    # ---- AvgPool(1,8) + Linear fused into mask M; one wide store per step ----
    lane = jax.lax.broadcasted_iota(jnp.int32, (1, OUT_W), 1)
    row = jnp.zeros((1, OUT_W), jnp.float32)
    for b in range(tb):
        sb = jnp.sum(y4[:, b * TP1_W:(b + 1) * TP1_W] * m_ref[...],
                     keepdims=True)                              # (1, 1)
        row = jnp.where(lane == b, sb, row)
    out_ref[0] = row


# ------------------------------- wrapper ---------------------------------------
def eegnet_forward(x, params, *, tb=2, ck1=CK1):
    """x: (B, C=20, T=800) float32 -> (logits (B, num_classes-1), 0)."""
    assert K1 % ck1 == 0
    B = x.shape[0]
    W_all, bias_all, p4, W2c, b2c, M = fuse_params(params, ck1=ck1)

    B_pad = ((B + tb - 1) // tb) * tb
    G = B_pad // tb
    n_w = tb * T_W

    # one wrapper pad that provides conv padding + electrode + lane padding,
    # then stack the tb examples of each grid step along the time axis.
    xp = jnp.pad(x, ((0, B_pad - B), (0, C_PAD - C),
                     (PAD_L, T_W - T_IN - PAD_L)))               # (B_pad, 32, 896)
    xp = xp.reshape(G, tb, C_PAD, T_W).transpose(0, 2, 1, 3).reshape(
        G, C_PAD, n_w)                                           # (G, 32, tb*896)

    kern = functools.partial(eegnet_kernel, tb=tb, ck1=ck1,
                             roll_like_jnp=_roll_like_jnp())

    def const_spec(a):
        nd = a.ndim
        return pl.BlockSpec(a.shape, lambda g, _nd=nd: (0,) * _nd)

    in_specs = [pl.BlockSpec((1, C_PAD, n_w), lambda g: (g, 0, 0))]
    in_specs += [const_spec(w) for w in (W_all, bias_all, p4, W2c, b2c, M)]
    out_spec = pl.BlockSpec((1, 1, OUT_W), lambda g: (g, 0, 0))

    out = pl.pallas_call(
        kern,
        out_shape=jax.ShapeDtypeStruct((G, 1, OUT_W), jnp.float32),
        grid_spec=pltpu.PrefetchScalarGridSpec(
            num_scalar_prefetch=0,
            grid=(G,),
            in_specs=in_specs,
            out_specs=out_spec,
            scratch_shapes=[
                pltpu.VMEM((2, ck1 * C_PAD, n_w), jnp.bfloat16),  # im2col chunk x2
                pltpu.VMEM((FD, n_w), jnp.float32),               # block-1 f32 acc
                pltpu.VMEM((FD, n_w), jnp.bfloat16),              # ELU'd y2 (bf16)
                pltpu.VMEM((K2 * FD, tb * TP1_W), jnp.bfloat16),  # block-2 im2col
            ],
        ),
        compiler_params=pltpu.CompilerParams(
            dimension_semantics=("parallel",),
            vmem_limit_bytes=32 * 1024 * 1024,
        ),
    )(xp, W_all, bias_all, p4, W2c, b2c, M)

    logits = out[:, 0, :tb].reshape(B_pad, 1)[:B]
    return logits, 0


# --------------------------- parameter construction ----------------------------
def _fold_bn(gamma, beta, mean, var):
    scale = gamma / jnp.sqrt(var + EPS)
    bias = beta - mean * scale
    return scale, bias


def make_params(key):
    """Raw (torch-equivalent, eval-folded BN) parameters."""
    ks = jax.random.split(key, 17)
    nrm = lambda k, shp, s: s * jax.random.normal(k, shp, dtype=jnp.float32)
    uni = lambda k, shp: jax.random.uniform(k, shp, dtype=jnp.float32)

    w1 = nrm(ks[0], (F1, K1), 0.2)                      # Conv2d(1,F1,(1,K1))
    s1, b1 = _fold_bn(1.0 + nrm(ks[1], (F1,), 0.1), nrm(ks[2], (F1,), 0.1),
                      nrm(ks[3], (F1,), 0.05), 1.0 + 0.2 * uni(ks[4], (F1,)))

    w2 = nrm(ks[5], (FD, C), 0.3)                       # Conv2dWithConstraint
    norms = jnp.sqrt(jnp.sum(w2 * w2, axis=1, keepdims=True))
    w2 = jnp.where(norms > 1.0, w2 / (norms + 1e-7), w2)   # renorm p=2 maxnorm=1
    s2, b2 = _fold_bn(1.0 + nrm(ks[6], (FD,), 0.1), nrm(ks[7], (FD,), 0.1),
                      nrm(ks[8], (FD,), 0.05), 1.0 + 0.2 * uni(ks[9], (FD,)))

    w3 = nrm(ks[10], (FD, K2), 0.2)                     # depthwise temporal conv
    w4 = nrm(ks[11], (F2, FD), 0.2)                     # pointwise conv
    s3, b3 = _fold_bn(1.0 + nrm(ks[12], (F2,), 0.1), nrm(ks[13], (F2,), 0.1),
                      nrm(ks[14], (F2,), 0.05), 1.0 + 0.2 * uni(ks[15], (F2,)))

    wlin = nrm(ks[16], (1, FEAT), 0.1).reshape(F2, T_P2)  # Linear(FEAT, 1)
    return (w1, s1, b1, w2, s2, b2, w3, w4, s3, b3, wlin)


def fuse_params(params, *, ck1=CK1):
    """Fold the linear chains of the network into MXU-friendly bf16 weights."""
    (w1, bn1s, bn1b, w2, bn2s, bn2b, w3, w4, bn3s, bn3b, wlin) = params
    nchunk = K1 // ck1

    # block 1: conv1 + BN1 + depthwise spatial conv + BN2, chunked over taps
    f_of_o = jnp.arange(FD) // D                                      # (64,)
    wk = (bn2s * bn1s[f_of_o])[:, None] * w1[f_of_o]                  # (64, K1)
    W3d = wk[:, :, None] * w2[:, None, :]                             # (64,K1,C)
    W3d = jnp.pad(W3d, ((0, 0), (0, 0), (0, C_PAD - C)))              # (64,K1,32)
    W_all = W3d.reshape(FD, nchunk, ck1 * C_PAD).transpose(1, 0, 2)   # (nc,64,ck1*32)
    bias_all = (bn2s * bn1b[f_of_o] * jnp.sum(w2, axis=1) + bn2b)[:, None]

    # AvgPool(1,4) + insertion of block-2 conv padding, lane-padded to 256.
    # Rows >= 4*T_P1 are zero (neutralizes roll wraparound / invalid conv cols).
    t = jnp.arange(T_W)[:, None]
    j = jnp.arange(T_P1)[None, :]
    core = jnp.where((t >= 4 * j) & (t < 4 * j + 4), 0.25, 0.0)
    p4 = jnp.zeros((T_W, TP1_W), jnp.float32).at[:, PAD2:PAD2 + T_P1].set(core)

    # block 2: depthwise conv + pointwise conv + BN3
    W2c = ((bn3s[:, None] * w4)[:, None, :] * w3.T[None, :, :]).reshape(
        F2, K2 * FD)
    b2c = bn3b[:, None]

    # AvgPool(1,8) + Linear fused into a (F2, TP1_W) mask (zero for t >= 200)
    t2 = jnp.arange(TP1_W)
    M = jnp.where((t2 < 8 * T_P2)[None, :],
                  wlin[:, jnp.clip(t2 // 8, 0, T_P2 - 1)] / 8.0, 0.0)

    return (W_all.astype(jnp.bfloat16), bias_all.astype(jnp.float32),
            p4.astype(jnp.bfloat16), W2c.astype(jnp.bfloat16),
            b2c.astype(jnp.float32), M.astype(jnp.float32))


# ------------------------------ pure-JAX reference -----------------------------
def eegnet_reference(x, params):
    (w1, bn1s, bn1b, w2, bn2s, bn2b, w3, w4, bn3s, bn3b, wlin) = params
    B = x.shape[0]
    dn = ("NCHW", "OIHW", "NCHW")
    hp = jax.lax.Precision.HIGHEST
    y = x[:, None]                                                   # (B,1,20,800)
    y = jax.lax.conv_general_dilated(y, w1.reshape(F1, 1, 1, K1), (1, 1),
                                     [(0, 0), (PAD_L, PAD_L)],
                                     dimension_numbers=dn, precision=hp)
    y = y * bn1s.reshape(1, F1, 1, 1) + bn1b.reshape(1, F1, 1, 1)
    y = jax.lax.conv_general_dilated(y, w2.reshape(FD, 1, C, 1), (1, 1),
                                     [(0, 0), (0, 0)], dimension_numbers=dn,
                                     feature_group_count=F1, precision=hp)
    y = y * bn2s.reshape(1, FD, 1, 1) + bn2b.reshape(1, FD, 1, 1)
    y = jnp.where(y > 0, y, jnp.exp(jnp.minimum(y, 0.0)) - 1.0)
    y = y[..., :(T1 // 4) * 4].reshape(B, FD, 1, T_P1, 4).mean(-1)
    y = jax.lax.conv_general_dilated(y, w3.reshape(FD, 1, 1, K2), (1, 1),
                                     [(0, 0), (PAD2, PAD2)],
                                     dimension_numbers=dn,
                                     feature_group_count=FD, precision=hp)
    y = jax.lax.conv_general_dilated(y, w4.reshape(F2, FD, 1, 1), (1, 1),
                                     [(0, 0), (0, 0)], dimension_numbers=dn,
                                     precision=hp)
    y = y * bn3s.reshape(1, F2, 1, 1) + bn3b.reshape(1, F2, 1, 1)
    y = jnp.where(y > 0, y, jnp.exp(jnp.minimum(y, 0.0)) - 1.0)
    y = y[..., :(T2 // 8) * 8].reshape(B, F2, 1, T_P2, 8).mean(-1)
    return jnp.dot(y.reshape(B, -1), wlin.reshape(-1, 1), precision=hp)


# ----------------------------------- main ---------------------------------------
if __name__ == "__main__":
    key = jax.random.PRNGKey(0)
    kx, kp = jax.random.split(key)
    B = 8
    x = jax.random.normal(kx, (B, C, T_IN), dtype=jnp.float32)
    params = make_params(kp)

    logits, aux = eegnet_forward(x, params, tb=2)
    logits = jax.block_until_ready(logits)
    assert logits.shape == (B, NUM_CLASSES - 1)

    ref = jax.block_until_ready(eegnet_reference(x, params))
    assert jnp.allclose(logits, ref, atol=5e-2, rtol=5e-2), (logits, ref)

    print("KERNEL_OK")
</pallas_src>

<mosaic_0001>
module attributes {stable_mosaic.version = 11 : i64} {
  func.func @probe(%arg0: memref<8x128xf32, #tpu.memory_space<vmem>>, %arg1: memref<8x128xf32, #tpu.memory_space<vmem>>) attributes {dimension_semantics = [], scalar_prefetch = 0 : i64, scratch_operands = 0 : i64, tpu.core_type = #tpu.core_type<tc>} {
    %c0 = arith.constant 0 : index
    %c0_0 = arith.constant 0 : index
    %0 = vector.load %arg0[%c0, %c0_0] : memref<8x128xf32, #tpu.memory_space<vmem>>, vector<8x128xf32>
    %c1_i32 = arith.constant 1 : i32
    %1 = tpu.dynamic_rotate %0 by %c1_i32 dim 1 : vector<8x128xf32>, i32 -> vector<8x128xf32>
    %c0_1 = arith.constant 0 : index
    %c0_2 = arith.constant 0 : index
    %2 = vector.load %arg1[%c0_1, %c0_2] : memref<8x128xf32, #tpu.memory_space<vmem>>, vector<8x128xf32>
    tpu.vector_store %arg1[%c0_1, %c0_2], %1 {strides = array<i32>} : memref<8x128xf32, #tpu.memory_space<vmem>>, vector<8x128xf32>,
    return
  }
}

</mosaic_0001>

<llo_original>
// kernel: tpu_custom_call.1
$region0: #{tpu_custom_call.1}
  #allocation0 [shape = 'u32[]', space=smem, size = 0x4, offset = 0x4, fixed_abs, tag = 'smem constant byte address 0x4 - core index']
  #allocation1 [shape = 'u32[144,128]{1,0:T(1,128)}', space=vmem, size = 0x12000, scoped, tag = 'internal scratch']
  %s0 = inlined_call_operand.hbm [shape: f32[8,128], index: 0, kind: input, shape index: {}]
  %s1 = inlined_call_operand.hbm [shape: f32[8,128], index: 1, kind: output, shape index: {}]
  %s2 = sld [smem:[#allocation0]]
  $region18: #{tpu_custom_call.1} parent=0
    _
  %s4 = ssub.s32 1, %s2
  %s5 = scalar_select 0, %s4, %s2
  $region1: #{tpu_custom_call.1} parent=0
    #allocation2 [shape = 'u8[4096]{0}', space=vmem, size = 0x1000, scoped, tag = 'input window, operand 0, single buffered']
    #allocation3 [shape = 's32[1]{0}', space=sflag, size = 0x4, scoped, tag = 'scoped memory for tpu_custom_call.1']
    #allocation4 [shape = 's32[1]{0}', space=sflag, size = 0x4, scoped, tag = 'scoped memory for tpu_custom_call.1']
    #allocation5 [shape = 'u8[4096]{0}', space=vmem, size = 0x1000, scoped, tag = 'output window, operand 0, single buffered']
    %6 = vsyncpa [#allocation3], 0
    %7 = vsyncpa [#allocation4], 0
    // Predicated region
    $region2: #{tpu_custom_call.1} parent=1 // pred_check
      _
    $region3: #{tpu_custom_call.1} parent=1 // pred_check_branch
      %9 = sbr.rel (0) target = $region5
    $region4: #{tpu_custom_call.1} parent=1 // pred_region
      %s11 = ssub.s32 128, 128
      %12 = vsyncadd [#allocation3], %s11
      %s14 = sshll.u32 [#allocation2], 4
      %s15 = int_to_ptr.vmem [resolvable:$true] %s14
      %17 = dma.hbm_to_vmem [thread:$0]  %s0, 128, %s15, [#allocation3]
    $region5: #{tpu_custom_call.1} parent=1 // pred_fallthru
      _
    // Predicated region
    $region6: #{tpu_custom_call.1} parent=1 // pred_check
      _
    $region7: #{tpu_custom_call.1} parent=1 // pred_check_branch
      %19 = sbr.rel (0) target = $region9
    $region8: #{tpu_custom_call.1} parent=1 // pred_region
      %20 = dma.done [#allocation3], 128
    $region9: #{tpu_custom_call.1} parent=1 // pred_fallthru
      _
    %v21 = vld [vmem:[#allocation2] sm:$0xff]
    %22 = vrot.lane.b32.xlu0 %v21, 1
    %v23 = vpop.permute.xlu0 %22
    %24 = vst [vmem:[#allocation5] sm:$0xff] %v23
    // Predicated region
    $region10: #{tpu_custom_call.1} parent=1 // pred_check
      _
    $region11: #{tpu_custom_call.1} parent=1 // pred_check_branch
      %26 = sbr.rel (0) target = $region13
    $region12: #{tpu_custom_call.1} parent=1 // pred_region
      %s28 = ssub.s32 128, 128
      %29 = vsyncadd [#allocation4], %s28
      %s31 = sshll.u32 [#allocation5], 4
      %s32 = int_to_ptr.vmem [resolvable:$true] %s31
      %34 = dma.vmem_to_hbm [thread:$0]  %s32, 128, %s1, [#allocation4]
    $region13: #{tpu_custom_call.1} parent=1 // pred_fallthru
      _
    // Predicated region
    $region14: #{tpu_custom_call.1} parent=1 // pred_check
      _
    $region15: #{tpu_custom_call.1} parent=1 // pred_check_branch
      %36 = sbr.rel (0) target = $region17
    $region16: #{tpu_custom_call.1} parent=1 // pred_region
      %37 = dma.done [#allocation4], 128
    $region17: #{tpu_custom_call.1} parent=1 // pred_fallthru
      _
    %38 = vsyncpa [#allocation3], 1
    %39 = vsyncpa [#allocation4], 1

</llo_original>
